<compile_context>
chip_gen: v6e
topology: v6e:2x2x1
jax: 0.10.0
libtpu: 0.0.40
codegen_flags: <defaults>
</compile_context>

<pallas_src>
import jax
import jax.numpy as jnp
from jax.experimental import pallas as pl
from jax.experimental.pallas import tpu as pltpu


def scale3d_kernel(g_ref, b_ref, x_ref, o_ref):
    # g_ref / b_ref: (TR, 1) per-row scale/shift tile (VMEM, resident over j).
    # x_ref / o_ref: (TR, TS) lane-dense data tile (VMEM).
    x = x_ref[...].astype(jnp.float32)
    g = g_ref[...].astype(jnp.float32)
    b = b_ref[...].astype(jnp.float32)
    o_ref[...] = (x * g + b).astype(o_ref.dtype)


def _tpu_target():
    """Generation-aware (target_tile_bytes, vmem_limit_bytes_or_None, is_v7x)."""
    kind = ""
    try:
        kind = jax.devices()[0].device_kind.lower()
    except Exception:
        pass
    if "v7" in kind or "7x" in kind:
        # ~6 MiB tiles -> ~24 MiB live (4 buffers); raise scoped VMEM for headroom.
        return 6 << 20, 40 << 20, True
    if "v6" in kind:
        # ~4 MiB tiles -> ~16 MiB live, well inside the 32 MiB default scope.
        return 4 << 20, None, False
    if "v5" in kind and ("lite" in kind or "v5e" in kind):
        # ~2 MiB tiles -> ~8 MiB live, inside the 16 MiB default scope.
        return 2 << 20, None, False
    # Unknown generation (v4, v5p, interpret, ...): conservative default.
    return 2 << 20, None, False


def _choose_tiles(nrows, ncols, itemsize, target_bytes):
    """Pick a lane-/sublane-dense (row_tile, lane_tile) of ~target_bytes.

    Grows the lane (last) dim first for long contiguous DMA rows and wide
    unmasked stores; rows are aligned to the packed-dtype sublane granularity.
    """
    # Sublane granularity: 8 rows for 4-byte, 16 for 2-byte, 32 for 1-byte.
    sub = max(8, 32 // max(1, itemsize))

    # --- lane (last) dim -------------------------------------------------
    # Widest lane tile such that a minimal-row (sub) block still fits budget.
    max_lane = max(128, target_bytes // (sub * itemsize))
    if ncols <= max_lane:
        ts = ncols                          # full extent: always a legal block dim
    else:
        cap = (max_lane // 128) * 128
        ts = 0
        # Prefer a multiple of 128 that divides ncols -> no ragged tail,
        # every output store lane-dense, every DMA full-width.
        if ncols % 128 == 0:
            for cand in range(cap, 127, -128):
                if ncols % cand == 0:
                    ts = cand
                    break
        if ts == 0:
            ts = cap                        # ragged tail handled by masked stores

    # --- sublane (second-to-last) dim ------------------------------------
    rows_budget = max(sub, target_bytes // max(1, ts * itemsize))
    tr = max(sub, (rows_budget // sub) * sub)
    if tr >= nrows:
        tr = nrows                          # full extent: always legal
    return tr, ts


def scale3d(x, gamma, beta, *, target_bytes=None, vmem_limit_bytes=None):
    """Pallas implementation of Scale3d.forward.

    x: (N, C, D, H, W); gamma/beta: (C,).  Returns same shape/dtype as x.
    """
    N, C, D, H, W = x.shape
    S = D * H * W
    NC = N * C

    gen_target, gen_vmem, is_v7x = _tpu_target()
    if target_bytes is None:
        target_bytes = gen_target
        if vmem_limit_bytes is None:
            vmem_limit_bytes = gen_vmem

    # Contiguous reshape (no data movement): row r = n*C + c holds channel c
    # of sample n, so per-row parameters are gamma tiled N times.
    x2 = x.reshape(NC, S)
    g_rows = jnp.tile(gamma, N).reshape(NC, 1)
    b_rows = jnp.tile(beta, N).reshape(NC, 1)

    tr, ts = _choose_tiles(NC, S, x.dtype.itemsize, target_bytes)

    # v7x has 2 TensorCores: make sure the parallel grid has >= 2 blocks so
    # both cores get work (otherwise ~2x HBM bandwidth sits idle).
    if is_v7x and pl.cdiv(NC, tr) * pl.cdiv(S, ts) < 2:
        if S >= 256:
            ts = max(128, ((S // 2) // 128) * 128)
        elif NC >= 16:
            tr = max(8, ((NC // 2) // 8) * 8)

    grid = (pl.cdiv(NC, tr), pl.cdiv(S, ts))   # j innermost: gamma/beta stay resident

    cp_kwargs = dict(dimension_semantics=("parallel", "parallel"))
    if vmem_limit_bytes is not None:
        cp_kwargs["vmem_limit_bytes"] = vmem_limit_bytes

    out = pl.pallas_call(
        scale3d_kernel,
        out_shape=jax.ShapeDtypeStruct((NC, S), x.dtype),
        grid=grid,
        in_specs=[
            pl.BlockSpec((tr, 1), lambda i, j: (i, 0)),    # gamma rows
            pl.BlockSpec((tr, 1), lambda i, j: (i, 0)),    # beta rows
            pl.BlockSpec((tr, ts), lambda i, j: (i, j)),   # x tile
        ],
        out_specs=pl.BlockSpec((tr, ts), lambda i, j: (i, j)),
        compiler_params=pltpu.CompilerParams(**cp_kwargs),
    )(g_rows, b_rows, x2)

    return out.reshape(N, C, D, H, W)


if __name__ == "__main__":
    key = jax.random.PRNGKey(0)

    # --- test 1: f32, small shape, generation-default tiling -------------
    N, C, D, H, W = 2, 4, 4, 8, 16          # S = 512
    x = jax.random.normal(key, (N, C, D, H, W), dtype=jnp.float32)
    gamma = jnp.ones((C,), jnp.float32) + 0.1 * jnp.arange(C, dtype=jnp.float32)
    beta = jnp.zeros((C,), jnp.float32) - 0.05 * jnp.arange(C, dtype=jnp.float32)

    y = jax.block_until_ready(scale3d(x, gamma, beta))
    y_ref = x * gamma.reshape(1, C, 1, 1, 1) + beta.reshape(1, C, 1, 1, 1)
    assert y.shape == x.shape and y.dtype == x.dtype
    assert jnp.allclose(y, y_ref, atol=1e-6, rtol=1e-6)

    # --- test 2: bf16 activations with f32 params (output cast path) -----
    x_bf16 = x.astype(jnp.bfloat16)
    y_bf16 = jax.block_until_ready(scale3d(x_bf16, gamma, beta))
    y_bf16_ref = (
        x_bf16.astype(jnp.float32) * gamma.reshape(1, C, 1, 1, 1)
        + beta.reshape(1, C, 1, 1, 1)
    ).astype(jnp.bfloat16)
    assert y_bf16.dtype == jnp.bfloat16
    assert jnp.allclose(
        y_bf16.astype(jnp.float32), y_bf16_ref.astype(jnp.float32),
        atol=1e-2, rtol=1e-2,
    )

    # --- test 3: forced tiny tiles -> multi-block grid with ragged tails --
    N3, C3, D3, H3, W3 = 2, 6, 8, 15, 21     # NC = 12, S = 2520 (not /128)
    x3 = jax.random.normal(jax.random.PRNGKey(1), (N3, C3, D3, H3, W3), jnp.float32)
    g3 = 0.5 + 0.2 * jnp.arange(C3, dtype=jnp.float32)
    b3 = -1.0 + 0.3 * jnp.arange(C3, dtype=jnp.float32)
    y3 = jax.block_until_ready(scale3d(x3, g3, b3, target_bytes=1 << 15))
    y3_ref = x3 * g3.reshape(1, C3, 1, 1, 1) + b3.reshape(1, C3, 1, 1, 1)
    assert jnp.allclose(y3, y3_ref, atol=1e-6, rtol=1e-6)

    print("KERNEL_OK")
</pallas_src>

<mosaic_0001>
module attributes {stable_mosaic.version = 11 : i64} {
  func.func @scale3d_kernel(%arg0: i32, %arg1: i32, %arg2: memref<8x1xf32, #tpu.memory_space<vmem>>, %arg3: memref<8x1xf32, #tpu.memory_space<vmem>>, %arg4: memref<8x512xf32, #tpu.memory_space<vmem>>, %arg5: memref<8x512xf32, #tpu.memory_space<vmem>>) attributes {dimension_semantics = [#tpu.dimension_semantics<parallel>, #tpu.dimension_semantics<parallel>], iteration_bounds = array<i64: 1, 1>, scalar_prefetch = 0 : i64, scratch_operands = 0 : i64, tpu.core_type = #tpu.core_type<tc>, window_params = [{transform_indices = @transform_0, window_bounds = array<i64: 8, 1>}, {transform_indices = @transform_1, window_bounds = array<i64: 8, 1>}, {transform_indices = @transform_2, window_bounds = array<i64: 8, 512>}, {transform_indices = @transform_3, window_bounds = array<i64: 8, 512>}]} {
    %c0 = arith.constant 0 : index
    %c0_0 = arith.constant 0 : index
    %0 = vector.load %arg4[%c0, %c0_0] : memref<8x512xf32, #tpu.memory_space<vmem>>, vector<8x512xf32>
    %c0_1 = arith.constant 0 : index
    %c0_2 = arith.constant 0 : index
    %1 = vector.load %arg2[%c0_1, %c0_2] : memref<8x1xf32, #tpu.memory_space<vmem>>, vector<8x1xf32>
    %c0_3 = arith.constant 0 : index
    %c0_4 = arith.constant 0 : index
    %2 = vector.load %arg3[%c0_3, %c0_4] : memref<8x1xf32, #tpu.memory_space<vmem>>, vector<8x1xf32>
    %3 = vector.broadcast %1 : vector<8x1xf32> to vector<8x512xf32>
    %4 = arith.mulf %0, %3 : vector<8x512xf32>
    %5 = vector.broadcast %2 : vector<8x1xf32> to vector<8x512xf32>
    %6 = arith.addf %4, %5 : vector<8x512xf32>
    %c0_5 = arith.constant 0 : index
    %c0_6 = arith.constant 0 : index
    %7 = vector.load %arg5[%c0_5, %c0_6] : memref<8x512xf32, #tpu.memory_space<vmem>>, vector<8x512xf32>
    tpu.vector_store %arg5[%c0_5, %c0_6], %6 {strides = array<i32>} : memref<8x512xf32, #tpu.memory_space<vmem>>, vector<8x512xf32>,
    return
  }
  func.func @transform_0(%arg0: i32, %arg1: i32) -> (i32, i32) {
    %c0_i32 = arith.constant 0 : i32
    %c0_i32_0 = arith.constant 0 : i32
    return %arg0, %c0_i32 : i32, i32
  }
  func.func @transform_1(%arg0: i32, %arg1: i32) -> (i32, i32) {
    %c0_i32 = arith.constant 0 : i32
    %c0_i32_0 = arith.constant 0 : i32
    return %arg0, %c0_i32 : i32, i32
  }
  func.func @transform_2(%arg0: i32, %arg1: i32) -> (i32, i32) {
    %c0_i32 = arith.constant 0 : i32
    return %arg0, %arg1 : i32, i32
  }
  func.func @transform_3(%arg0: i32, %arg1: i32) -> (i32, i32) {
    %c0_i32 = arith.constant 0 : i32
    return %arg0, %arg1 : i32, i32
  }
}

</mosaic_0001>

<llo_original>
// kernel: tpu_custom_call.1
$region0: #{tpu_custom_call.1}
  #allocation0 [shape = 'u32[]', space=smem, size = 0x4, offset = 0x4, fixed_abs, tag = 'smem constant byte address 0x4 - core index']
  #allocation1 [shape = 'u32[144,128]{1,0:T(1,128)}', space=vmem, size = 0x12000, scoped, tag = 'internal scratch']
  %s0 = inlined_call_operand.vmem [shape: f32[8,1], index: 0, kind: input, shape index: {}]
  %s1 = inlined_call_operand.vmem [shape: f32[8,1], index: 1, kind: input, shape index: {}]
  %s2 = inlined_call_operand.hbm [shape: f32[8,512], index: 2, kind: input, shape index: {}]
  %s3 = inlined_call_operand.hbm [shape: f32[8,512], index: 3, kind: output, shape index: {}]
  %s4 = sld [smem:[#allocation0]]
  $region26: #{tpu_custom_call.1} parent=0
    _
  %s6 = ssub.s32 1, %s4
  %s7 = scalar_select 0, %s6, %s4
  $region1: #{tpu_custom_call.1} parent=0
    #allocation2 [shape = 'u8[16384]{0}', space=vmem, size = 0x4000, scoped, tag = 'input window, operand 2, single buffered']
    #allocation3 [shape = 's32[1]{0}', space=sflag, size = 0x4, scoped, tag = 'scoped memory for tpu_custom_call.1']
    #allocation4 [shape = 's32[1]{0}', space=sflag, size = 0x4, scoped, tag = 'scoped memory for tpu_custom_call.1']
    #allocation5 [shape = 'u8[16384]{0}', space=vmem, size = 0x4000, scoped, tag = 'output window, operand 0, single buffered']
    %8 = vsyncpa [#allocation3], 0
    %9 = vsyncpa [#allocation4], 0
    // Predicated region
    $region2: #{tpu_custom_call.1} parent=1 // pred_check
      _
    $region3: #{tpu_custom_call.1} parent=1 // pred_check_branch
      %11 = sbr.rel (0) target = $region5
    $region4: #{tpu_custom_call.1} parent=1 // pred_region
      _
    $region5: #{tpu_custom_call.1} parent=1 // pred_fallthru
      _
    // Predicated region
    $region6: #{tpu_custom_call.1} parent=1 // pred_check
      _
    $region7: #{tpu_custom_call.1} parent=1 // pred_check_branch
      %13 = sbr.rel (0) target = $region9
    $region8: #{tpu_custom_call.1} parent=1 // pred_region
      _
    $region9: #{tpu_custom_call.1} parent=1 // pred_fallthru
      _
    // Predicated region
    $region10: #{tpu_custom_call.1} parent=1 // pred_check
      _
    $region11: #{tpu_custom_call.1} parent=1 // pred_check_branch
      %15 = sbr.rel (0) target = $region13
    $region12: #{tpu_custom_call.1} parent=1 // pred_region
      %s17 = ssub.s32 512, 512
      %18 = vsyncadd [#allocation3], %s17
      %s20 = sshll.u32 [#allocation2], 4
      %s21 = int_to_ptr.vmem [resolvable:$true] %s20
      %23 = dma.hbm_to_vmem [thread:$0]  %s2, 512, %s21, [#allocation3]
    $region13: #{tpu_custom_call.1} parent=1 // pred_fallthru
      _
    // Predicated region
    $region14: #{tpu_custom_call.1} parent=1 // pred_check
      _
    $region15: #{tpu_custom_call.1} parent=1 // pred_check_branch
      %25 = sbr.rel (0) target = $region17
    $region16: #{tpu_custom_call.1} parent=1 // pred_region
      %26 = dma.done [#allocation3], 512
    $region17: #{tpu_custom_call.1} parent=1 // pred_fallthru
      _
    %v27 = vld [vmem:[#allocation2] sm:$0xff]
    %v28 = vld [vmem:[#allocation2 + $0x8] sm:$0xff]
    %v29 = vld [vmem:[#allocation2 + $0x10] sm:$0xff]
    %v30 = vld [vmem:[#allocation2 + $0x18] sm:$0xff]
    %v31 = vld [vmem:[%s0] sm:$0xff]
    %v32 = vld [vmem:[%s1] sm:$0xff]
    %34 = vset.pattern.permute.xlu0 0
    %35 = vperm.xlu0 %34, %v31
    %v36 = vpop.permute.xlu0 %35
    %v38 = vmul.f32 %v27, %v36
    %v39 = vmul.f32 %v28, %v36
    %v40 = vmul.f32 %v29, %v36
    %v41 = vmul.f32 %v30, %v36
    %43 = vset.pattern.permute.xlu0 0
    %44 = vperm.xlu0 %43, %v32
    %v45 = vpop.permute.xlu0 %44
    %v47 = vadd.f32 %v38, %v45
    %v48 = vadd.f32 %v39, %v45
    %v49 = vadd.f32 %v40, %v45
    %v50 = vadd.f32 %v41, %v45
    %51 = vst [vmem:[#allocation5] sm:$0xff] %v47
    %52 = vst [vmem:[#allocation5 + $0x8] sm:$0xff] %v48
    %53 = vst [vmem:[#allocation5 + $0x10] sm:$0xff] %v49
    %54 = vst [vmem:[#allocation5 + $0x18] sm:$0xff] %v50
    // Predicated region
    $region18: #{tpu_custom_call.1} parent=1 // pred_check
      _
    $region19: #{tpu_custom_call.1} parent=1 // pred_check_branch
      %56 = sbr.rel (0) target = $region21
    $region20: #{tpu_custom_call.1} parent=1 // pred_region
      %s58 = ssub.s32 512, 512
      %59 = vsyncadd [#allocation4], %s58
      %s61 = sshll.u32 [#allocation5], 4
      %s62 = int_to_ptr.vmem [resolvable:$true] %s61
      %64 = dma.vmem_to_hbm [thread:$0]  %s62, 512, %s3, [#allocation4]
    $region21: #{tpu_custom_call.1} parent=1 // pred_fallthru
      _
    // Predicated region
    $region22: #{tpu_custom_call.1} parent=1 // pred_check
      _
    $region23: #{tpu_custom_call.1} parent=1 // pred_check_branch
      %66 = sbr.rel (0) target = $region25
    $region24: #{tpu_custom_call.1} parent=1 // pred_region
      %67 = dma.done [#allocation4], 512
    $region25: #{tpu_custom_call.1} parent=1 // pred_fallthru
      _
    %68 = vsyncpa [#allocation3], 1
    %69 = vsyncpa [#allocation4], 1

</llo_original>
